<compile_context>
chip_gen: v7x
topology: tpu7x:2x2x1
jax: 0.10.0
libtpu: 0.0.40
codegen_flags: <defaults>
</compile_context>

<pallas_src>
import jax
import jax.numpy as jnp
import numpy as np
from jax.experimental import pallas as pl
from jax.experimental.pallas import tpu as pltpu

LEAKY = 0.01
EPS = 1e-5


def _leaky(x, alpha=LEAKY):
    # max(x, a*x) == leaky_relu for 0 < a < 1: one VPU max instead of cmp+select.
    return jnp.maximum(x, alpha * x)


def _make_kernel(H):
    """Kernel closed over the per-image height H (needed for boundary masks)."""
    h_pow2 = (H & (H - 1)) == 0

    def kernel(x_ref, s1_ref, t1_ref, wb1_ref,
               s2_ref, t2_ref, wb2_ref, b2_ref, o_ref):
        NHb, WC = x_ref.shape                     # lane-dense: WC = W * C
        x = x_ref[...].astype(jnp.float32)

        # Row-boundary masks, computed once and reused by both convs.
        rows = jax.lax.broadcasted_iota(jnp.int32, (NHb, WC), 0)
        h_in_img = (rows & (H - 1)) if h_pow2 else (rows % H)
        not_first_row = h_in_img != 0             # h-1 exists inside the image
        not_last_row = h_in_img != (H - 1)        # h+1 exists inside the image

        def shift_prev(a):
            # y[r] = a[r-1] within each image; zero at the top image row.
            # Cyclic sublane roll (XLU slot) + mask of wrapped / cross-image rows.
            return jnp.where(not_first_row, pltpu.roll(a, shift=1, axis=0), 0.0)

        def shift_next(a):
            # y[r] = a[r+1] within each image; zero at the bottom image row.
            return jnp.where(not_last_row,
                             pltpu.roll(a, shift=NHb - 1, axis=0), 0.0)

        def conv3x3(a, wb_ref):
            # Three lane-dense matmuls against the kh blocks of the banded
            # weights; the H-axis taps are shifts of the *outputs* (no 3x-wide
            # patches slab, no lane concatenate).  The W-axis SAME padding is
            # encoded as zeros inside the banded weights.
            a16 = a.astype(jnp.bfloat16)
            y0 = jnp.dot(a16, wb_ref[0], preferred_element_type=jnp.float32)
            y1 = jnp.dot(a16, wb_ref[1], preferred_element_type=jnp.float32)
            y2 = jnp.dot(a16, wb_ref[2], preferred_element_type=jnp.float32)
            return shift_prev(y0) + y1 + shift_next(y2)

        # BN1 (folded scale/shift) + LeakyReLU
        a = _leaky(x * s1_ref[...] + t1_ref[...])
        # Conv1 (3x3, padding=1); its bias is folded into t2 by the wrapper.
        a = conv3x3(a, wb1_ref)
        # TODO(synk): Dropout2d is identity in eval mode; training-mode
        # per-channel dropout (channel zeroing + 1/(1-p) scaling) not implemented.
        # BN2 + LeakyReLU
        a = _leaky(a * s2_ref[...] + t2_ref[...])
        # Conv2 (3x3, padding=1) + bias, final LeakyReLU (no residual add,
        # matching the PyTorch forward).
        a = conv3x3(a, wb2_ref)
        o_ref[...] = _leaky(a + b2_ref[...]).astype(o_ref.dtype)

    return kernel


def _banded_weights(w_hwio, W):
    """(3,3,Ci,Co) HWIO conv weights -> (3, W*Ci, W*Co) banded im2col blocks.

    Block kh multiplies activations shifted by (kh - 1) along H; within a
    block, entry [wp*Ci+ci, w*Co+co] = w[kh, wp-w+1, ci, co] when |wp-w| <= 1,
    else 0 (the zeros implement the W-axis SAME padding).
    """
    Ci, Co = w_hwio.shape[2], w_hwio.shape[3]
    blocks = []
    for kh in range(3):
        b = jnp.zeros((W * Ci, W * Co), jnp.float32)
        for kw in range(3):
            shift = jnp.eye(W, k=1 - kw, dtype=jnp.float32)  # S[wp,w]=1 iff wp==w+kw-1
            b = b + jnp.kron(shift, w_hwio[kh, kw].astype(jnp.float32))
        blocks.append(b)
    return jnp.stack(blocks, axis=0)


def _tensorcores_per_chip():
    """Best-effort TensorCore count per chip (2 on v7x megacore, 1 on v5e/v6e)."""
    try:
        d = jax.devices()[0]
        n = getattr(d, "num_cores", None)
        if n:
            return max(1, int(n))
        if "v7" in str(getattr(d, "device_kind", "")).lower():
            return 2
    except Exception:
        pass
    return 1


def residual_block(x_nhwc, s1, t1, w1, b1, s2, t2, w2, b2, *, batch_block=None):
    """x_nhwc: (N,H,W,C); w*: (3,3,C,C) HWIO; s*,t*: folded BN scale/shift; b*: conv bias."""
    N, H, W, C = x_nhwc.shape
    WC = W * C

    if batch_block is None:
        cores = _tensorcores_per_chip()
        batch_block = N                 # whole batch in one grid step (v5e/v6e)
        if cores > 1:
            # Smallest split giving >= one grid step per TensorCore (v7x).
            for steps in range(cores, N + 1):
                if N % steps == 0:
                    batch_block = N // steps
                    break
    if batch_block != N and (batch_block * H) % 8 != 0:
        batch_block = N                 # keep the (8,128) block constraint
    assert N % batch_block == 0
    NHb = batch_block * H
    grid = (N // batch_block,)

    # Lane-dense view of the input / output: (N*H, W*C).  W*C should be a
    # multiple of 128 for unmasked lane-dense stores; other shapes stay correct
    # (block == full dim) but fall back to masked partial stores.
    x2 = x_nhwc.reshape(N * H, WC)

    def tile_chan(v):
        # per-channel (C,) vector -> (1, W*C) so index w*C + c maps to channel c
        return jnp.tile(v.astype(jnp.float32), W).reshape(1, WC)

    s1t = tile_chan(s1)
    t1t = tile_chan(t1)
    s2t = tile_chan(s2)
    t2t = tile_chan(t2 + s2 * b1)       # fold conv1 bias into the BN2 shift
    b2t = tile_chan(b2)

    # bf16 MXU operands (accumulation stays f32 via preferred_element_type).
    wb1 = _banded_weights(w1, W).astype(jnp.bfloat16)
    wb2 = _banded_weights(w2, W).astype(jnp.bfloat16)

    vec_spec = pl.BlockSpec((1, WC), lambda i: (0, 0))
    w_spec = pl.BlockSpec((3, WC, WC), lambda i: (0, 0, 0))

    grid_spec = pltpu.PrefetchScalarGridSpec(
        num_scalar_prefetch=0,
        grid=grid,
        in_specs=[
            pl.BlockSpec((NHb, WC), lambda i: (i, 0)),
            vec_spec, vec_spec, w_spec,
            vec_spec, vec_spec, w_spec, vec_spec,
        ],
        out_specs=pl.BlockSpec((NHb, WC), lambda i: (i, 0)),
    )

    # Explicit VMEM budget: in/out double buffers + (double-buffered) bf16
    # weight stacks + ~a handful of live f32 intermediates, plus headroom;
    # clamped well under v7x's 64 MiB physical VMEM.
    slab = NHb * WC * 4
    wbytes = 2 * 3 * WC * WC * 2
    vmem_limit = min(max(12 * slab + 2 * wbytes + (4 << 20), 8 << 20), 48 << 20)

    out2 = pl.pallas_call(
        _make_kernel(H),
        out_shape=jax.ShapeDtypeStruct((N * H, WC), x_nhwc.dtype),
        grid_spec=grid_spec,
        compiler_params=pltpu.CompilerParams(
            dimension_semantics=("parallel",),
            vmem_limit_bytes=vmem_limit),
    )(x2, s1t, t1t, wb1, s2t, t2t, wb2, b2t)
    return out2.reshape(N, H, W, C)


def reference(x_nhwc, g1, be1, m1, v1, w1, cb1, g2, be2, m2, v2, w2, cb2):
    def bn(x, g, b, m, v):
        return (x - m) / jnp.sqrt(v + EPS) * g + b

    def conv(x, w, b):
        y = jax.lax.conv_general_dilated(
            x, w, (1, 1), 'SAME',
            dimension_numbers=('NHWC', 'HWIO', 'NHWC'))
        return y + b

    a = jax.nn.leaky_relu(bn(x_nhwc, g1, be1, m1, v1), LEAKY)
    a = conv(a, w1, cb1)
    a = jax.nn.leaky_relu(bn(a, g2, be2, m2, v2), LEAKY)
    a = conv(a, w2, cb2)
    return jax.nn.leaky_relu(a, LEAKY)


if __name__ == "__main__":
    N, C, H, W = 2, 8, 16, 16          # W*C = 128 -> fully lane-dense layout
    key = jax.random.PRNGKey(0)
    ks = jax.random.split(key, 13)

    # input, PyTorch-style NCHW, then transposed to NHWC for the kernel
    x_nchw = jax.random.normal(ks[0], (N, C, H, W), jnp.float32)
    x_nhwc = jnp.transpose(x_nchw, (0, 2, 3, 1))

    # BatchNorm1 params (eval-mode running stats)
    g1 = jax.random.uniform(ks[1], (C,), jnp.float32, 0.5, 1.5)
    be1 = 0.1 * jax.random.normal(ks[2], (C,), jnp.float32)
    m1 = 0.1 * jax.random.normal(ks[3], (C,), jnp.float32)
    v1 = jax.random.uniform(ks[4], (C,), jnp.float32, 0.5, 1.5)
    # Conv1 (HWIO) + bias
    w1 = jax.random.normal(ks[5], (3, 3, C, C), jnp.float32) / np.sqrt(9 * C)
    cb1 = 0.1 * jax.random.normal(ks[6], (C,), jnp.float32)
    # BatchNorm2
    g2 = jax.random.uniform(ks[7], (C,), jnp.float32, 0.5, 1.5)
    be2 = 0.1 * jax.random.normal(ks[8], (C,), jnp.float32)
    m2 = 0.1 * jax.random.normal(ks[9], (C,), jnp.float32)
    v2 = jax.random.uniform(ks[10], (C,), jnp.float32, 0.5, 1.5)
    # Conv2
    w2 = jax.random.normal(ks[11], (3, 3, C, C), jnp.float32) / np.sqrt(9 * C)
    cb2 = 0.1 * jax.random.normal(ks[12], (C,), jnp.float32)

    # fold BN into per-channel scale/shift for the kernel
    s1 = g1 / jnp.sqrt(v1 + EPS); t1 = be1 - m1 * s1
    s2 = g2 / jnp.sqrt(v2 + EPS); t2 = be2 - m2 * s2

    out = residual_block(x_nhwc, s1, t1, w1, cb1, s2, t2, w2, cb2)
    out = jax.block_until_ready(out)

    ref = reference(x_nhwc, g1, be1, m1, v1, w1, cb1,
                    g2, be2, m2, v2, w2, cb2)
    ref = jax.block_until_ready(ref)

    assert out.shape == (N, H, W, C)
    # Tolerance loosened for the bf16 MXU operands (f32 accumulation).
    np.testing.assert_allclose(np.asarray(out), np.asarray(ref),
                               rtol=2e-2, atol=5e-2)
    print("KERNEL_OK")
</pallas_src>

<mosaic_0001>
module attributes {stable_mosaic.version = 11 : i64} {
  func.func @kernel(%arg0: i32, %arg1: memref<32x128xf32, #tpu.memory_space<vmem>>, %arg2: memref<1x128xf32, #tpu.memory_space<vmem>>, %arg3: memref<1x128xf32, #tpu.memory_space<vmem>>, %arg4: memref<3x128x128xbf16, #tpu.memory_space<vmem>>, %arg5: memref<1x128xf32, #tpu.memory_space<vmem>>, %arg6: memref<1x128xf32, #tpu.memory_space<vmem>>, %arg7: memref<3x128x128xbf16, #tpu.memory_space<vmem>>, %arg8: memref<1x128xf32, #tpu.memory_space<vmem>>, %arg9: memref<32x128xf32, #tpu.memory_space<vmem>>) attributes {dimension_semantics = [#tpu.dimension_semantics<parallel>], iteration_bounds = array<i64: 1>, scalar_prefetch = 0 : i64, scratch_operands = 0 : i64, tpu.core_type = #tpu.core_type<tc>, window_params = [{transform_indices = @transform_0, window_bounds = array<i64: 32, 128>}, {pipeline_mode = #tpu.pipeline_mode<synchronous>, transform_indices = @transform_1, window_bounds = array<i64: 1, 128>}, {pipeline_mode = #tpu.pipeline_mode<synchronous>, transform_indices = @transform_2, window_bounds = array<i64: 1, 128>}, {pipeline_mode = #tpu.pipeline_mode<synchronous>, transform_indices = @transform_3, window_bounds = array<i64: 3, 128, 128>}, {pipeline_mode = #tpu.pipeline_mode<synchronous>, transform_indices = @transform_4, window_bounds = array<i64: 1, 128>}, {pipeline_mode = #tpu.pipeline_mode<synchronous>, transform_indices = @transform_5, window_bounds = array<i64: 1, 128>}, {pipeline_mode = #tpu.pipeline_mode<synchronous>, transform_indices = @transform_6, window_bounds = array<i64: 3, 128, 128>}, {pipeline_mode = #tpu.pipeline_mode<synchronous>, transform_indices = @transform_7, window_bounds = array<i64: 1, 128>}, {transform_indices = @transform_8, window_bounds = array<i64: 32, 128>}]} {
    %c0 = arith.constant 0 : index
    %c0_0 = arith.constant 0 : index
    %0 = vector.load %arg1[%c0, %c0_0] : memref<32x128xf32, #tpu.memory_space<vmem>>, vector<32x128xf32>
    %1 = tpu.iota {dimensions = array<i32: 0>} : vector<32x128xi32>
    %c15_i32 = arith.constant 15 : i32
    %2 = vector.broadcast %c15_i32 : i32 to vector<32x128xi32>
    %3 = arith.andi %1, %2 : vector<32x128xi32>
    %c0_i32 = arith.constant 0 : i32
    %4 = vector.broadcast %c0_i32 : i32 to vector<32x128xi32>
    %5 = arith.cmpi ne, %3, %4 : vector<32x128xi32>
    %c15_i32_1 = arith.constant 15 : i32
    %6 = vector.broadcast %c15_i32_1 : i32 to vector<32x128xi32>
    %7 = arith.cmpi ne, %3, %6 : vector<32x128xi32>
    %c0_2 = arith.constant 0 : index
    %c0_3 = arith.constant 0 : index
    %8 = vector.load %arg2[%c0_2, %c0_3] : memref<1x128xf32, #tpu.memory_space<vmem>>, vector<1x128xf32>
    %9 = vector.broadcast %8 : vector<1x128xf32> to vector<32x128xf32>
    %10 = arith.mulf %0, %9 : vector<32x128xf32>
    %c0_4 = arith.constant 0 : index
    %c0_5 = arith.constant 0 : index
    %11 = vector.load %arg3[%c0_4, %c0_5] : memref<1x128xf32, #tpu.memory_space<vmem>>, vector<1x128xf32>
    %12 = vector.broadcast %11 : vector<1x128xf32> to vector<32x128xf32>
    %13 = arith.addf %10, %12 : vector<32x128xf32>
    %cst = arith.constant 0.00999999977 : f32
    %14 = vector.broadcast %cst : f32 to vector<32x128xf32>
    %15 = arith.mulf %14, %13 : vector<32x128xf32>
    %16 = arith.maximumf %13, %15 : vector<32x128xf32>
    %17 = arith.truncf %16 : vector<32x128xf32> to vector<32x128xbf16>
    %c0_6 = arith.constant 0 : index
    %c0_7 = arith.constant 0 : index
    %c0_8 = arith.constant 0 : index
    %18 = vector.load %arg4[%c0_6, %c0_7, %c0_8] : memref<3x128x128xbf16, #tpu.memory_space<vmem>>, vector<1x128x128xbf16>
    %19 = vector.shape_cast %18 : vector<1x128x128xbf16> to vector<128x128xbf16>
    %cst_9 = arith.constant dense<0.000000e+00> : vector<32x128xf32>
    %20 = tpu.matmul %17, %19, %cst_9 {dimension_numbers = #tpu.dot_dimension_numbers<[1], [0], [0], [1], [0, 0, 1, 1], [], []>} : vector<32x128xbf16>, vector<128x128xbf16>, vector<32x128xf32> -> vector<32x128xf32>
    %c1 = arith.constant 1 : index
    %c0_10 = arith.constant 0 : index
    %c0_11 = arith.constant 0 : index
    %21 = vector.load %arg4[%c1, %c0_10, %c0_11] : memref<3x128x128xbf16, #tpu.memory_space<vmem>>, vector<1x128x128xbf16>
    %22 = vector.shape_cast %21 : vector<1x128x128xbf16> to vector<128x128xbf16>
    %cst_12 = arith.constant dense<0.000000e+00> : vector<32x128xf32>
    %23 = tpu.matmul %17, %22, %cst_12 {dimension_numbers = #tpu.dot_dimension_numbers<[1], [0], [0], [1], [0, 0, 1, 1], [], []>} : vector<32x128xbf16>, vector<128x128xbf16>, vector<32x128xf32> -> vector<32x128xf32>
    %c2 = arith.constant 2 : index
    %c0_13 = arith.constant 0 : index
    %c0_14 = arith.constant 0 : index
    %24 = vector.load %arg4[%c2, %c0_13, %c0_14] : memref<3x128x128xbf16, #tpu.memory_space<vmem>>, vector<1x128x128xbf16>
    %25 = vector.shape_cast %24 : vector<1x128x128xbf16> to vector<128x128xbf16>
    %cst_15 = arith.constant dense<0.000000e+00> : vector<32x128xf32>
    %26 = tpu.matmul %17, %25, %cst_15 {dimension_numbers = #tpu.dot_dimension_numbers<[1], [0], [0], [1], [0, 0, 1, 1], [], []>} : vector<32x128xbf16>, vector<128x128xbf16>, vector<32x128xf32> -> vector<32x128xf32>
    %c1_i32 = arith.constant 1 : i32
    %27 = tpu.dynamic_rotate %20 by %c1_i32 dim 0 : vector<32x128xf32>, i32 -> vector<32x128xf32>
    %cst_16 = arith.constant 0.000000e+00 : f32
    %28 = vector.broadcast %cst_16 : f32 to vector<32x128xf32>
    %29 = arith.select %5, %27, %28 : vector<32x128xi1>, vector<32x128xf32>
    %30 = arith.addf %29, %23 : vector<32x128xf32>
    %c31_i32 = arith.constant 31 : i32
    %31 = tpu.dynamic_rotate %26 by %c31_i32 dim 0 : vector<32x128xf32>, i32 -> vector<32x128xf32>
    %cst_17 = arith.constant 0.000000e+00 : f32
    %32 = vector.broadcast %cst_17 : f32 to vector<32x128xf32>
    %33 = arith.select %7, %31, %32 : vector<32x128xi1>, vector<32x128xf32>
    %34 = arith.addf %30, %33 : vector<32x128xf32>
    %c0_18 = arith.constant 0 : index
    %c0_19 = arith.constant 0 : index
    %35 = vector.load %arg5[%c0_18, %c0_19] : memref<1x128xf32, #tpu.memory_space<vmem>>, vector<1x128xf32>
    %36 = vector.broadcast %35 : vector<1x128xf32> to vector<32x128xf32>
    %37 = arith.mulf %34, %36 : vector<32x128xf32>
    %c0_20 = arith.constant 0 : index
    %c0_21 = arith.constant 0 : index
    %38 = vector.load %arg6[%c0_20, %c0_21] : memref<1x128xf32, #tpu.memory_space<vmem>>, vector<1x128xf32>
    %39 = vector.broadcast %38 : vector<1x128xf32> to vector<32x128xf32>
    %40 = arith.addf %37, %39 : vector<32x128xf32>
    %cst_22 = arith.constant 0.00999999977 : f32
    %41 = vector.broadcast %cst_22 : f32 to vector<32x128xf32>
    %42 = arith.mulf %41, %40 : vector<32x128xf32>
    %43 = arith.maximumf %40, %42 : vector<32x128xf32>
    %44 = arith.truncf %43 : vector<32x128xf32> to vector<32x128xbf16>
    %c0_23 = arith.constant 0 : index
    %c0_24 = arith.constant 0 : index
    %c0_25 = arith.constant 0 : index
    %45 = vector.load %arg7[%c0_23, %c0_24, %c0_25] : memref<3x128x128xbf16, #tpu.memory_space<vmem>>, vector<1x128x128xbf16>
    %46 = vector.shape_cast %45 : vector<1x128x128xbf16> to vector<128x128xbf16>
    %cst_26 = arith.constant dense<0.000000e+00> : vector<32x128xf32>
    %47 = tpu.matmul %44, %46, %cst_26 {dimension_numbers = #tpu.dot_dimension_numbers<[1], [0], [0], [1], [0, 0, 1, 1], [], []>} : vector<32x128xbf16>, vector<128x128xbf16>, vector<32x128xf32> -> vector<32x128xf32>
    %c1_27 = arith.constant 1 : index
    %c0_28 = arith.constant 0 : index
    %c0_29 = arith.constant 0 : index
    %48 = vector.load %arg7[%c1_27, %c0_28, %c0_29] : memref<3x128x128xbf16, #tpu.memory_space<vmem>>, vector<1x128x128xbf16>
    %49 = vector.shape_cast %48 : vector<1x128x128xbf16> to vector<128x128xbf16>
    %cst_30 = arith.constant dense<0.000000e+00> : vector<32x128xf32>
    %50 = tpu.matmul %44, %49, %cst_30 {dimension_numbers = #tpu.dot_dimension_numbers<[1], [0], [0], [1], [0, 0, 1, 1], [], []>} : vector<32x128xbf16>, vector<128x128xbf16>, vector<32x128xf32> -> vector<32x128xf32>
    %c2_31 = arith.constant 2 : index
    %c0_32 = arith.constant 0 : index
    %c0_33 = arith.constant 0 : index
    %51 = vector.load %arg7[%c2_31, %c0_32, %c0_33] : memref<3x128x128xbf16, #tpu.memory_space<vmem>>, vector<1x128x128xbf16>
    %52 = vector.shape_cast %51 : vector<1x128x128xbf16> to vector<128x128xbf16>
    %cst_34 = arith.constant dense<0.000000e+00> : vector<32x128xf32>
    %53 = tpu.matmul %44, %52, %cst_34 {dimension_numbers = #tpu.dot_dimension_numbers<[1], [0], [0], [1], [0, 0, 1, 1], [], []>} : vector<32x128xbf16>, vector<128x128xbf16>, vector<32x128xf32> -> vector<32x128xf32>
    %c1_i32_35 = arith.constant 1 : i32
    %54 = tpu.dynamic_rotate %47 by %c1_i32_35 dim 0 : vector<32x128xf32>, i32 -> vector<32x128xf32>
    %cst_36 = arith.constant 0.000000e+00 : f32
    %55 = vector.broadcast %cst_36 : f32 to vector<32x128xf32>
    %56 = arith.select %5, %54, %55 : vector<32x128xi1>, vector<32x128xf32>
    %57 = arith.addf %56, %50 : vector<32x128xf32>
    %c31_i32_37 = arith.constant 31 : i32
    %58 = tpu.dynamic_rotate %53 by %c31_i32_37 dim 0 : vector<32x128xf32>, i32 -> vector<32x128xf32>
    %cst_38 = arith.constant 0.000000e+00 : f32
    %59 = vector.broadcast %cst_38 : f32 to vector<32x128xf32>
    %60 = arith.select %7, %58, %59 : vector<32x128xi1>, vector<32x128xf32>
    %61 = arith.addf %57, %60 : vector<32x128xf32>
    %c0_39 = arith.constant 0 : index
    %c0_40 = arith.constant 0 : index
    %62 = vector.load %arg8[%c0_39, %c0_40] : memref<1x128xf32, #tpu.memory_space<vmem>>, vector<1x128xf32>
    %63 = vector.broadcast %62 : vector<1x128xf32> to vector<32x128xf32>
    %64 = arith.addf %61, %63 : vector<32x128xf32>
    %cst_41 = arith.constant 0.00999999977 : f32
    %65 = vector.broadcast %cst_41 : f32 to vector<32x128xf32>
    %66 = arith.mulf %65, %64 : vector<32x128xf32>
    %67 = arith.maximumf %64, %66 : vector<32x128xf32>
    %c0_42 = arith.constant 0 : index
    %c0_43 = arith.constant 0 : index
    %68 = vector.load %arg9[%c0_42, %c0_43] : memref<32x128xf32, #tpu.memory_space<vmem>>, vector<32x128xf32>
    tpu.vector_store %arg9[%c0_42, %c0_43], %67 {strides = array<i32>} : memref<32x128xf32, #tpu.memory_space<vmem>>, vector<32x128xf32>,
    return
  }
  func.func @transform_0(%arg0: i32) -> (i32, i32) {
    %c0_i32 = arith.constant 0 : i32
    %c0_i32_0 = arith.constant 0 : i32
    return %arg0, %c0_i32 : i32, i32
  }
  func.func @transform_1(%arg0: i32) -> (i32, i32) {
    %c0_i32 = arith.constant 0 : i32
    %c0_i32_0 = arith.constant 0 : i32
    %c0_i32_1 = arith.constant 0 : i32
    return %c0_i32, %c0_i32_0 : i32, i32
  }
  func.func @transform_2(%arg0: i32) -> (i32, i32) {
    %c0_i32 = arith.constant 0 : i32
    %c0_i32_0 = arith.constant 0 : i32
    %c0_i32_1 = arith.constant 0 : i32
    return %c0_i32, %c0_i32_0 : i32, i32
  }
  func.func @transform_3(%arg0: i32) -> (i32, i32, i32) {
    %c0_i32 = arith.constant 0 : i32
    %c0_i32_0 = arith.constant 0 : i32
    %c0_i32_1 = arith.constant 0 : i32
    %c0_i32_2 = arith.constant 0 : i32
    return %c0_i32, %c0_i32_0, %c0_i32_1 : i32, i32, i32
  }
  func.func @transform_4(%arg0: i32) -> (i32, i32) {
    %c0_i32 = arith.constant 0 : i32
    %c0_i32_0 = arith.constant 0 : i32
    %c0_i32_1 = arith.constant 0 : i32
    return %c0_i32, %c0_i32_0 : i32, i32
  }
  func.func @transform_5(%arg0: i32) -> (i32, i32) {
    %c0_i32 = arith.constant 0 : i32
    %c0_i32_0 = arith.constant 0 : i32
    %c0_i32_1 = arith.constant 0 : i32
    return %c0_i32, %c0_i32_0 : i32, i32
  }
  func.func @transform_6(%arg0: i32) -> (i32, i32, i32) {
    %c0_i32 = arith.constant 0 : i32
    %c0_i32_0 = arith.constant 0 : i32
    %c0_i32_1 = arith.constant 0 : i32
    %c0_i32_2 = arith.constant 0 : i32
    return %c0_i32, %c0_i32_0, %c0_i32_1 : i32, i32, i32
  }
  func.func @transform_7(%arg0: i32) -> (i32, i32) {
    %c0_i32 = arith.constant 0 : i32
    %c0_i32_0 = arith.constant 0 : i32
    %c0_i32_1 = arith.constant 0 : i32
    return %c0_i32, %c0_i32_0 : i32, i32
  }
  func.func @transform_8(%arg0: i32) -> (i32, i32) {
    %c0_i32 = arith.constant 0 : i32
    %c0_i32_0 = arith.constant 0 : i32
    return %arg0, %c0_i32 : i32, i32
  }
}

</mosaic_0001>

<llo_original>
// kernel: tpu_custom_call.1
$region0: #{tpu_custom_call.1}
  #allocation0 [shape = 'u32[]', space=smem, size = 0x4, offset = 0x4, fixed_abs, tag = 'smem constant byte address 0x4 - core index']
  #allocation1 [shape = 'u32[144,128]{1,0:T(1,128)}', space=vmem, size = 0x12000, scoped, tag = 'internal scratch']
  %s0 = inlined_call_operand.hbm [shape: f32[32,128], index: 0, kind: input, shape index: {}]
  %s1 = inlined_call_operand.vmem [shape: f32[1,128], index: 1, kind: input, shape index: {}]
  %s2 = inlined_call_operand.vmem [shape: f32[1,128], index: 2, kind: input, shape index: {}]
  %s3 = inlined_call_operand.hbm [shape: bf16[3,128,128], index: 3, kind: input, shape index: {}]
  %s4 = inlined_call_operand.vmem [shape: f32[1,128], index: 4, kind: input, shape index: {}]
  %s5 = inlined_call_operand.vmem [shape: f32[1,128], index: 5, kind: input, shape index: {}]
  %s6 = inlined_call_operand.hbm [shape: bf16[3,128,128], index: 6, kind: input, shape index: {}]
  %s7 = inlined_call_operand.vmem [shape: f32[1,128], index: 7, kind: input, shape index: {}]
  %s8 = inlined_call_operand.hbm [shape: f32[32,128], index: 8, kind: output, shape index: {}]
  %s9 = sld [smem:[#allocation0]]
  $region54: #{tpu_custom_call.1} parent=0
    _
  %s11 = ssub.s32 1, %s9
  %s12 = scalar_select 0, %s11, %s9
  $region1: #{tpu_custom_call.1} parent=0
    #allocation2 [shape = 'u8[16384]{0}', space=vmem, size = 0x4000, scoped, tag = 'input window, operand 0, single buffered']
    #allocation3 [shape = 's32[1]{0}', space=sflag, size = 0x4, scoped, tag = 'scoped memory for tpu_custom_call.1']
    #allocation4 [shape = 's32[1]{0}', space=sflag, size = 0x4, scoped, tag = 'scoped memory for tpu_custom_call.1']
    #allocation5 [shape = 'u8[98304]{0}', space=vmem, size = 0x18000, scoped, tag = 'input window, operand 3, single buffered']
    #allocation6 [shape = 's32[1]{0}', space=sflag, size = 0x4, scoped, tag = 'scoped memory for tpu_custom_call.1']
    #allocation7 [shape = 'u8[98304]{0}', space=vmem, size = 0x18000, scoped, tag = 'input window, operand 6, single buffered']
    #allocation8 [shape = 'u8[16384]{0}', space=vmem, size = 0x4000, scoped, tag = 'output window, operand 0, single buffered']
    %13 = vsyncpa [#allocation3], 0
    %14 = vsyncpa [#allocation6], 0
    %15 = vsyncpa [#allocation4], 0
    // Predicated region
    $region2: #{tpu_custom_call.1} parent=1 // pred_check
      _
    $region3: #{tpu_custom_call.1} parent=1 // pred_check_branch
      %17 = sbr.rel (0) target = $region5
    $region4: #{tpu_custom_call.1} parent=1 // pred_region
      %s19 = ssub.s32 512, 512
      %20 = vsyncadd [#allocation3], %s19
      %s21 = sshll.u32 [#allocation2], 4
      %s22 = int_to_ptr.vmem [resolvable:$true] %s21
      %27 = dma.hbm_to_vmem [thread:$0]  %s0, 512, %s22, [#allocation3], 128, 128, 8
    $region5: #{tpu_custom_call.1} parent=1 // pred_fallthru
      _
    // Predicated region
    $region6: #{tpu_custom_call.1} parent=1 // pred_check
      _
    $region7: #{tpu_custom_call.1} parent=1 // pred_check_branch
      %29 = sbr.rel (0) target = $region9
    $region8: #{tpu_custom_call.1} parent=1 // pred_region
      _
    $region9: #{tpu_custom_call.1} parent=1 // pred_fallthru
      _
    // Predicated region
    $region10: #{tpu_custom_call.1} parent=1 // pred_check
      _
    $region11: #{tpu_custom_call.1} parent=1 // pred_check_branch
      %31 = sbr.rel (0) target = $region13
    $region12: #{tpu_custom_call.1} parent=1 // pred_region
      _
    $region13: #{tpu_custom_call.1} parent=1 // pred_fallthru
      _
    // Predicated region
    $region14: #{tpu_custom_call.1} parent=1 // pred_check
      _
    $region15: #{tpu_custom_call.1} parent=1 // pred_check_branch
      %33 = sbr.rel (0) target = $region17
    $region16: #{tpu_custom_call.1} parent=1 // pred_region
      %s35 = ssub.s32 3072, 3072
      %36 = vsyncadd [#allocation6], %s35
      %s37 = sshll.u32 [#allocation5], 4
      %s38 = int_to_ptr.vmem [resolvable:$true] %s37
      %43 = dma.hbm_to_vmem [thread:$0]  %s3, 3072, %s38, [#allocation6], 64, 64, 4
    $region17: #{tpu_custom_call.1} parent=1 // pred_fallthru
      _
    // Predicated region
    $region18: #{tpu_custom_call.1} parent=1 // pred_check
      _
    $region19: #{tpu_custom_call.1} parent=1 // pred_check_branch
      %45 = sbr.rel (0) target = $region21
    $region20: #{tpu_custom_call.1} parent=1 // pred_region
      _
    $region21: #{tpu_custom_call.1} parent=1 // pred_fallthru
      _
    // Predicated region
    $region22: #{tpu_custom_call.1} parent=1 // pred_check
      _
    $region23: #{tpu_custom_call.1} parent=1 // pred_check_branch
      %47 = sbr.rel (0) target = $region25
    $region24: #{tpu_custom_call.1} parent=1 // pred_region
      _
    $region25: #{tpu_custom_call.1} parent=1 // pred_fallthru
      _
    // Predicated region
    $region26: #{tpu_custom_call.1} parent=1 // pred_check
      _
    $region27: #{tpu_custom_call.1} parent=1 // pred_check_branch
      %49 = sbr.rel (0) target = $region29
    $region28: #{tpu_custom_call.1} parent=1 // pred_region
      %s51 = ssub.s32 3072, 3072
      %52 = vsyncadd [#allocation6], %s51
      %s53 = sshll.u32 [#allocation7], 4
      %s54 = int_to_ptr.vmem [resolvable:$true] %s53
      %59 = dma.hbm_to_vmem [thread:$0]  %s6, 3072, %s54, [#allocation6], 64, 64, 4
    $region29: #{tpu_custom_call.1} parent=1 // pred_fallthru
      _
    // Predicated region
    $region30: #{tpu_custom_call.1} parent=1 // pred_check
      _
    $region31: #{tpu_custom_call.1} parent=1 // pred_check_branch
      %61 = sbr.rel (0) target = $region33
    $region32: #{tpu_custom_call.1} parent=1 // pred_region
      _
    $region33: #{tpu_custom_call.1} parent=1 // pred_fallthru
      _
    // Predicated region
    $region34: #{tpu_custom_call.1} parent=1 // pred_check
      _
    $region35: #{tpu_custom_call.1} parent=1 // pred_check_branch
      %63 = sbr.rel (0) target = $region37
    $region36: #{tpu_custom_call.1} parent=1 // pred_region
      %64 = dma.done [#allocation3], 512
    $region37: #{tpu_custom_call.1} parent=1 // pred_fallthru
      _
    // Predicated region
    $region38: #{tpu_custom_call.1} parent=1 // pred_check
      _
    $region39: #{tpu_custom_call.1} parent=1 // pred_check_branch
      %66 = sbr.rel (0) target = $region41
    $region40: #{tpu_custom_call.1} parent=1 // pred_region
      %67 = dma.done [#allocation6], 3072
    $region41: #{tpu_custom_call.1} parent=1 // pred_fallthru
      _
    // Predicated region
    $region42: #{tpu_custom_call.1} parent=1 // pred_check
      _
    $region43: #{tpu_custom_call.1} parent=1 // pred_check_branch
      %69 = sbr.rel (0) target = $region45
    $region44: #{tpu_custom_call.1} parent=1 // pred_region
      %70 = dma.done [#allocation6], 3072
    $region45: #{tpu_custom_call.1} parent=1 // pred_fallthru
      _
    %v72 = vld [vmem:[#allocation2] sm:$0xff]
    %v73 = vld [vmem:[#allocation2 + $0x8] sm:$0xff]
    %v74 = vld [vmem:[#allocation2 + $0x10] sm:$0xff]
    %v75 = vld [vmem:[#allocation2 + $0x18] sm:$0xff]
    %v76 = vlaneseq
    %v77 = vshrl.u32 %v76, 7
    %v78 = vadd.s32 %v77, 8
    %v79 = vadd.s32 %v77, 16
    %v80 = vadd.s32 %v77, 24
    %v81 = vand.u32 %v77, 15
    %v82 = vand.u32 %v78, 15
    %v83 = vand.u32 %v79, 15
    %v84 = vand.u32 %v80, 15
    %vm85 = vcmp.ne.s32.totalorder %v81, 0
    %vm86 = vcmp.ne.s32.totalorder %v82, 0
    %vm87 = vcmp.ne.s32.totalorder %v83, 0
    %vm88 = vcmp.ne.s32.totalorder %v84, 0
    %vm89 = vcmp.ne.s32.totalorder %v81, 15
    %vm90 = vcmp.ne.s32.totalorder %v82, 15
    %vm91 = vcmp.ne.s32.totalorder %v83, 15
    %vm92 = vcmp.ne.s32.totalorder %v84, 15
    %v93 = vld [vmem:[%s1] sm:$0x1]
    %v95 = vlaneseq
    %v96 = vshrl.u32 %v95, 7
    %v97 = vsub.s32 0, %v96
    %v98 = vrot.slane %v93, %v97
    %v100 = vmul.f32 %v72, %v98
    %v101 = vmul.f32 %v73, %v98
    %v102 = vmul.f32 %v74, %v98
    %v103 = vmul.f32 %v75, %v98
    %v104 = vld [vmem:[%s2] sm:$0x1]
    %v106 = vlaneseq
    %v107 = vshrl.u32 %v106, 7
    %v108 = vsub.s32 0, %v107
    %v109 = vrot.slane %v104, %v108
    %v111 = vadd.f32 %v100, %v109
    %v112 = vadd.f32 %v101, %v109
    %v113 = vadd.f32 %v102, %v109
    %v114 = vadd.f32 %v103, %v109
    %v115 = vmul.f32 %v111, 0.01
    %v116 = vmul.f32 %v112, 0.01
    %v117 = vmul.f32 %v113, 0.01
    %v118 = vmul.f32 %v114, 0.01
    %v119 = vmax.f32 %v111, %v115
    %v120 = vmax.f32 %v112, %v116
    %v121 = vmax.f32 %v113, %v117
    %v122 = vmax.f32 %v114, %v118
    %v123 = vpack.c.bf16 %v120, %v119
    %v124 = vpack.c.bf16 %v122, %v121
    %v125 = vld [vmem:[#allocation5] sm:$0xf]
    %v126 = vld [vmem:[#allocation5 + $0x4] sm:$0xf]
    %v127 = vld [vmem:[#allocation5 + $0x8] sm:$0xf]
    %v128 = vld [vmem:[#allocation5 + $0xc] sm:$0xf]
    %v129 = vld [vmem:[#allocation5 + $0x10] sm:$0xf]
    %v130 = vld [vmem:[#allocation5 + $0x14] sm:$0xf]
    %v131 = vld [vmem:[#allocation5 + $0x18] sm:$0xf]
    %v132 = vld [vmem:[#allocation5 + $0x1c] sm:$0xf]
    %v133 = vld [vmem:[#allocation5 + $0x20] sm:$0xf]
    %v134 = vld [vmem:[#allocation5 + $0x24] sm:$0xf]
    %v135 = vld [vmem:[#allocation5 + $0x28] sm:$0xf]
    %v136 = vld [vmem:[#allocation5 + $0x2c] sm:$0xf]
    %v137 = vld [vmem:[#allocation5 + $0x30] sm:$0xf]
    %v138 = vld [vmem:[#allocation5 + $0x34] sm:$0xf]
    %v139 = vld [vmem:[#allocation5 + $0x38] sm:$0xf]
    %v140 = vld [vmem:[#allocation5 + $0x3c] sm:$0xf]
    %v157 = vunpack.c.l.b16 %v125
    %v158 = vunpack.c.l.b16 %v126
    %v159 = vunpack.c.l.b16 %v127
    %v160 = vunpack.c.l.b16 %v128
    %v161 = vunpack.c.l.b16 %v129
    %v162 = vunpack.c.l.b16 %v130
    %v163 = vunpack.c.l.b16 %v131
    %v164 = vunpack.c.l.b16 %v132
    %v165 = vunpack.c.l.b16 %v133
    %v166 = vunpack.c.l.b16 %v134
    %v167 = vunpack.c.l.b16 %v135
    %v168 = vunpack.c.l.b16 %v136
    %v169 = vunpack.c.l.b16 %v137
    %v170 = vunpack.c.l.b16 %v138
    %v171 = vunpack.c.l.b16 %v139
    %v172 = vunpack.c.l.b16 %v140
    %v173 = vpack.c.b16 %v158, %v157
    %v174 = vpack.c.b16 %v160, %v159
    %v175 = vpack.c.b16 %v162, %v161
    %v176 = vpack.c.b16 %v164, %v163
    %v177 = vpack.c.b16 %v166, %v165
    %v178 = vpack.c.b16 %v168, %v167
    %v179 = vpack.c.b16 %v170, %v169
    %v180 = vpack.c.b16 %v172, %v171
    %189 = vmatprep.subr.bf16.mxu0 0
    %190 = vmatpush1.bf16.msra.mxu0 %v173
    %191 = vmatprep.subr.bf16.mxu0 0
    %192 = vmatpush1.bf16.msra.mxu0 %v174
    %193 = vmatprep.subr.bf16.mxu0 0
    %194 = vmatpush1.bf16.msra.mxu0 %v175
    %195 = vmatprep.subr.bf16.mxu0 0
    %196 = vmatpush1.bf16.msra.mxu0 %v176
    %197 = vmatprep.subr.bf16.mxu0 0
    %198 = vmatpush1.bf16.msra.mxu0 %v177
    %199 = vmatprep.subr.bf16.mxu0 0
    %200 = vmatpush1.bf16.msra.mxu0 %v178
    %201 = vmatprep.subr.bf16.mxu0 0
    %202 = vmatpush1.bf16.msra.mxu0 %v179
    %203 = vmatprep.subr.bf16.mxu0 0
    %204 = vmatpush1.bf16.msra.mxu0 %v180
    %205 = vmatprep.subr.bf16.mxu0 0
    %206 = vmatpush1.bf16.msra.mxu0 0
    %207 = vmatprep.subr.bf16.mxu0 0
    %208 = vmatpush1.bf16.msra.mxu0 0
    %209 = vmatprep.subr.bf16.mxu0 0
    %210 = vmatpush1.bf16.msra.mxu0 0
    %211 = vmatprep.subr.bf16.mxu0 0
    %212 = vmatpush1.bf16.msra.mxu0 0
    %213 = vmatprep.subr.bf16.mxu0 0
    %214 = vmatpush1.bf16.msra.mxu0 0
    %215 = vmatprep.subr.bf16.mxu0 0
    %216 = vmatpush1.bf16.msra.mxu0 0
    %217 = vmatprep.subr.bf16.mxu0 0
    %218 = vmatpush1.bf16.msra.mxu0 0
    %219 = vmatprep.subr.bf16.mxu0 0
    %220 = vmatpush1.bf16.msra.mxu0 0
    %221 = vmatprep.mubr.bf16.mxu0 0
    %222 = vmatmul.mubr.bf16.gmra.mrb[0].mxu0 %v123
    %v223 = vpop.f32.mrb[0].mxu0
    %v224 = vadd.f32 0.0, %v223
    %v225 = vpop.f32.mrb[0].mxu0
    %v226 = vpop.f32.mrb[0].mxu0
    %v227 = vadd.f32 0.0, %v226
    %v228 = vpop.f32.mrb[0].mxu0
    %229 = vmatprep.mubr.bf16.mxu0 0
    %230 = vmatmul.mubr.bf16.gmra.mrb[0].mxu0 %v124
    %v231 = vpop.f32.mrb[0].mxu0
    %v232 = vadd.f32 0.0, %v231
    %v233 = vpop.f32.mrb[0].mxu0
    %v234 = vpop.f32.mrb[0].mxu0
    %v235 = vadd.f32 0.0, %v234
    %v236 = vpop.f32.mrb[0].mxu0
    %237 = vdwg.mxu0
    %s238 = scalar_lea.vmem [#allocation5], 64
    %v239 = vld [vmem:[%s238] sm:$0xf]
    %v240 = vld [vmem:[%s238 + $0x4] sm:$0xf]
    %v241 = vld [vmem:[%s238 + $0x8] sm:$0xf]
    %v242 = vld [vmem:[%s238 + $0xc] sm:$0xf]
    %v243 = vld [vmem:[%s238 + $0x10] sm:$0xf]
    %v244 = vld [vmem:[%s238 + $0x14] sm:$0xf]
    %v245 = vld [vmem:[%s238 + $0x18] sm:$0xf]
    %v246 = vld [vmem:[%s238 + $0x1c] sm:$0xf]
    %v247 = vld [vmem:[%s238 + $0x20] sm:$0xf]
    %v248 = vld [vmem:[%s238 + $0x24] sm:$0xf]
    %v249 = vld [vmem:[%s238 + $0x28] sm:$0xf]
    %v250 = vld [vmem:[%s238 + $0x2c] sm:$0xf]
    %v251 = vld [vmem:[%s238 + $0x30] sm:$0xf]
    %v252 = vld [vmem:[%s238 + $0x34] sm:$0xf]
    %v253 = vld [vmem:[%s238 + $0x38] sm:$0xf]
    %v254 = vld [vmem:[%s238 + $0x3c] sm:$0xf]
    %v271 = vunpack.c.l.b16 %v239
    %v272 = vunpack.c.l.b16 %v240
    %v273 = vunpack.c.l.b16 %v241
    %v274 = vunpack.c.l.b16 %v242
    %v275 = vunpack.c.l.b16 %v243
    %v276 = vunpack.c.l.b16 %v244
    %v277 = vunpack.c.l.b16 %v245
    %v278 = vunpack.c.l.b16 %v246
    %v279 = vunpack.c.l.b16 %v247
    %v280 = vunpack.c.l.b16 %v248
    %v281 = vunpack.c.l.b16 %v249
    %v282 = vunpack.c.l.b16 %v250
    %v283 = vunpack.c.l.b16 %v251
    %v284 = vunpack.c.l.b16 %v252
    %v285 = vunpack.c.l.b16 %v253
    %v286 = vunpack.c.l.b16 %v254
    %v287 = vpack.c.b16 %v272, %v271
    %v288 = vpack.c.b16 %v274, %v273
    %v289 = vpack.c.b16 %v276, %v275
    %v290 = vpack.c.b16 %v278, %v277
    %v291 = vpack.c.b16 %v280, %v279
    %v292 = vpack.c.b16 %v282, %v281
    %v293 = vpack.c.b16 %v284, %v283
    %v294 = vpack.c.b16 %v286, %v285
    %303 = vmatprep.subr.bf16.mxu0 0
    %304 = vmatpush1.bf16.msra.mxu0 %v287
    %305 = vmatprep.subr.bf16.mxu0 0
    %306 = vmatpush1.bf16.msra.mxu0 %v288
    %307 = vmatprep.subr.bf16.mxu0 0
    %308 = vmatpush1.bf16.msra.mxu0 %v289
    %309 = vmatprep.subr.bf16.mxu0 0
    %310 = vmatpush1.bf16.msra.mxu0 %v290
    %311 = vmatprep.subr.bf16.mxu0 0
    %312 = vmatpush1.bf16.msra.mxu0 %v291
    %313 = vmatprep.subr.bf16.mxu0 0
    %314 = vmatpush1.bf16.msra.mxu0 %v292
    %315 = vmatprep.subr.bf16.mxu0 0
    %316 = vmatpush1.bf16.msra.mxu0 %v293
    %317 = vmatprep.subr.bf16.mxu0 0
    %318 = vmatpush1.bf16.msra.mxu0 %v294
    %319 = vmatprep.subr.bf16.mxu0 0
    %320 = vmatpush1.bf16.msra.mxu0 0
    %321 = vmatprep.subr.bf16.mxu0 0
    %322 = vmatpush1.bf16.msra.mxu0 0
    %323 = vmatprep.subr.bf16.mxu0 0
    %324 = vmatpush1.bf16.msra.mxu0 0
    %325 = vmatprep.subr.bf16.mxu0 0
    %326 = vmatpush1.bf16.msra.mxu0 0
    %327 = vmatprep.subr.bf16.mxu0 0
    %328 = vmatpush1.bf16.msra.mxu0 0
    %329 = vmatprep.subr.bf16.mxu0 0
    %330 = vmatpush1.bf16.msra.mxu0 0
    %331 = vmatprep.subr.bf16.mxu0 0
    %332 = vmatpush1.bf16.msra.mxu0 0
    %333 = vmatprep.subr.bf16.mxu0 0
    %334 = vmatpush1.bf16.msra.mxu0 0
    %335 = vmatprep.mubr.bf16.mxu0 0
    %336 = vmatmul.mubr.bf16.gmra.mrb[0].mxu0 %v123
    %v337 = vpop.f32.mrb[0].mxu0
    %v338 = vadd.f32 0.0, %v337
    %v339 = vpop.f32.mrb[0].mxu0
    %v340 = vpop.f32.mrb[0].mxu0
    %v341 = vadd.f32 0.0, %v340
    %v342 = vpop.f32.mrb[0].mxu0
    %343 = vmatprep.mubr.bf16.mxu0 0
    %344 = vmatmul.mubr.bf16.gmra.mrb[0].mxu0 %v124
    %v345 = vpop.f32.mrb[0].mxu0
    %v346 = vadd.f32 0.0, %v345
    %v347 = vpop.f32.mrb[0].mxu0
    %v348 = vpop.f32.mrb[0].mxu0
    %v349 = vadd.f32 0.0, %v348
    %v350 = vpop.f32.mrb[0].mxu0
    %351 = vdwg.mxu0
    %s352 = scalar_lea.vmem [#allocation5], 128
    %v353 = vld [vmem:[%s352] sm:$0xf]
    %v354 = vld [vmem:[%s352 + $0x4] sm:$0xf]
    %v355 = vld [vmem:[%s352 + $0x8] sm:$0xf]
    %v356 = vld [vmem:[%s352 + $0xc] sm:$0xf]
    %v357 = vld [vmem:[%s352 + $0x10] sm:$0xf]
    %v358 = vld [vmem:[%s352 + $0x14] sm:$0xf]
    %v359 = vld [vmem:[%s352 + $0x18] sm:$0xf]
    %v360 = vld [vmem:[%s352 + $0x1c] sm:$0xf]
    %v361 = vld [vmem:[%s352 + $0x20] sm:$0xf]
    %v362 = vld [vmem:[%s352 + $0x24] sm:$0xf]
    %v363 = vld [vmem:[%s352 + $0x28] sm:$0xf]
    %v364 = vld [vmem:[%s352 + $0x2c] sm:$0xf]
    %v365 = vld [vmem:[%s352 + $0x30] sm:$0xf]
    %v366 = vld [vmem:[%s352 + $0x34] sm:$0xf]
    %v367 = vld [vmem:[%s352 + $0x38] sm:$0xf]
    %v368 = vld [vmem:[%s352 + $0x3c] sm:$0xf]
    %v385 = vunpack.c.l.b16 %v353
    %v386 = vunpack.c.l.b16 %v354
    %v387 = vunpack.c.l.b16 %v355
    %v388 = vunpack.c.l.b16 %v356
    %v389 = vunpack.c.l.b16 %v357
    %v390 = vunpack.c.l.b16 %v358
    %v391 = vunpack.c.l.b16 %v359
    %v392 = vunpack.c.l.b16 %v360
    %v393 = vunpack.c.l.b16 %v361
    %v394 = vunpack.c.l.b16 %v362
    %v395 = vunpack.c.l.b16 %v363
    %v396 = vunpack.c.l.b16 %v364
    %v397 = vunpack.c.l.b16 %v365
    %v398 = vunpack.c.l.b16 %v366
    %v399 = vunpack.c.l.b16 %v367
    %v400 = vunpack.c.l.b16 %v368
    %v401 = vpack.c.b16 %v386, %v385
    %v402 = vpack.c.b16 %v388, %v387
    %v403 = vpack.c.b16 %v390, %v389
    %v404 = vpack.c.b16 %v392, %v391
    %v405 = vpack.c.b16 %v394, %v393
    %v406 = vpack.c.b16 %v396, %v395
    %v407 = vpack.c.b16 %v398, %v397
    %v408 = vpack.c.b16 %v400, %v399
    %417 = vmatprep.subr.bf16.mxu0 0
    %418 = vmatpush1.bf16.msra.mxu0 %v401
    %419 = vmatprep.subr.bf16.mxu0 0
    %420 = vmatpush1.bf16.msra.mxu0 %v402
    %421 = vmatprep.subr.bf16.mxu0 0
    %422 = vmatpush1.bf16.msra.mxu0 %v403
    %423 = vmatprep.subr.bf16.mxu0 0
    %424 = vmatpush1.bf16.msra.mxu0 %v404
    %425 = vmatprep.subr.bf16.mxu0 0
    %426 = vmatpush1.bf16.msra.mxu0 %v405
    %427 = vmatprep.subr.bf16.mxu0 0
    %428 = vmatpush1.bf16.msra.mxu0 %v406
    %429 = vmatprep.subr.bf16.mxu0 0
    %430 = vmatpush1.bf16.msra.mxu0 %v407
    %431 = vmatprep.subr.bf16.mxu0 0
    %432 = vmatpush1.bf16.msra.mxu0 %v408
    %433 = vmatprep.subr.bf16.mxu0 0
    %434 = vmatpush1.bf16.msra.mxu0 0
    %435 = vmatprep.subr.bf16.mxu0 0
    %436 = vmatpush1.bf16.msra.mxu0 0
    %437 = vmatprep.subr.bf16.mxu0 0
    %438 = vmatpush1.bf16.msra.mxu0 0
    %439 = vmatprep.subr.bf16.mxu0 0
    %440 = vmatpush1.bf16.msra.mxu0 0
    %441 = vmatprep.subr.bf16.mxu0 0
    %442 = vmatpush1.bf16.msra.mxu0 0
    %443 = vmatprep.subr.bf16.mxu0 0
    %444 = vmatpush1.bf16.msra.mxu0 0
    %445 = vmatprep.subr.bf16.mxu0 0
    %446 = vmatpush1.bf16.msra.mxu0 0
    %447 = vmatprep.subr.bf16.mxu0 0
    %448 = vmatpush1.bf16.msra.mxu0 0
    %449 = vmatprep.mubr.bf16.mxu0 0
    %450 = vmatmul.mubr.bf16.gmra.mrb[0].mxu0 %v123
    %v451 = vpop.f32.mrb[0].mxu0
    %v452 = vadd.f32 0.0, %v451
    %v453 = vpop.f32.mrb[0].mxu0
    %v454 = vpop.f32.mrb[0].mxu0
    %v455 = vadd.f32 0.0, %v454
    %v456 = vpop.f32.mrb[0].mxu0
    %457 = vmatprep.mubr.bf16.mxu0 0
    %458 = vmatmul.mubr.bf16.gmra.mrb[0].mxu0 %v124
    %v459 = vpop.f32.mrb[0].mxu0
    %v460 = vadd.f32 0.0, %v459
    %v461 = vpop.f32.mrb[0].mxu0
    %v462 = vpop.f32.mrb[0].mxu0
    %v463 = vadd.f32 0.0, %v462
    %v464 = vpop.f32.mrb[0].mxu0
    %465 = vdwg.mxu0
    %v466 = vrot.slane %v224, 7
    %v467 = vrot.slane %v227, 7
    %v468 = vrot.slane %v232, 7
    %v469 = vrot.slane %v235, 7
    %vm470 = vcmp.lt.s32.totalorder %v77, 1
    %v471 = vsel %vm470, %v468, %v469
    %v472 = vsel %vm470, %v467, %v468
    %v473 = vsel %vm470, %v466, %v467
    %v474 = vsel %vm470, %v469, %v466
    %v475 = vsel %vm85, %v474, 0.0
    %v476 = vsel %vm86, %v473, 0.0
    %v477 = vsel %vm87, %v472, 0.0
    %v478 = vsel %vm88, %v471, 0.0
    %v479 = vadd.f32 %v475, %v338
    %v480 = vadd.f32 %v476, %v341
    %v481 = vadd.f32 %v477, %v346
    %v482 = vadd.f32 %v478, %v349
    %v483 = vrot.slane %v452, 1
    %v484 = vrot.slane %v455, 1
    %v485 = vrot.slane %v460, 1
    %v486 = vrot.slane %v463, 1
    %vm487 = vcmp.lt.s32.totalorder %v77, 7
    %v488 = vsel %vm487, %v485, %v486
    %v489 = vsel %vm487, %v484, %v485
    %v490 = vsel %vm487, %v483, %v484
    %v491 = vsel %vm487, %v486, %v483
    %v492 = vsel %vm89, %v490, 0.0
    %v493 = vsel %vm90, %v489, 0.0
    %v494 = vsel %vm91, %v488, 0.0
    %v495 = vsel %vm92, %v491, 0.0
    %v496 = vadd.f32 %v479, %v492
    %v497 = vadd.f32 %v480, %v493
    %v498 = vadd.f32 %v481, %v494
    %v499 = vadd.f32 %v482, %v495
    %v500 = vld [vmem:[%s4] sm:$0x1]
    %v502 = vlaneseq
    %v503 = vshrl.u32 %v502, 7
    %v504 = vsub.s32 0, %v503
    %v505 = vrot.slane %v500, %v504
    %v507 = vmul.f32 %v496, %v505
    %v508 = vmul.f32 %v497, %v505
    %v509 = vmul.f32 %v498, %v505
    %v510 = vmul.f32 %v499, %v505
    %v511 = vld [vmem:[%s5] sm:$0x1]
    %v513 = vlaneseq
    %v514 = vshrl.u32 %v513, 7
    %v515 = vsub.s32 0, %v514
    %v516 = vrot.slane %v511, %v515
    %v518 = vadd.f32 %v507, %v516
    %v519 = vadd.f32 %v508, %v516
    %v520 = vadd.f32 %v509, %v516
    %v521 = vadd.f32 %v510, %v516
    %v522 = vmul.f32 %v518, 0.01
    %v523 = vmul.f32 %v519, 0.01
    %v524 = vmul.f32 %v520, 0.01
    %v525 = vmul.f32 %v521, 0.01
    %v526 = vmax.f32 %v518, %v522
    %v527 = vmax.f32 %v519, %v523
    %v528 = vmax.f32 %v520, %v524
    %v529 = vmax.f32 %v521, %v525
    %v530 = vpack.c.bf16 %v527, %v526
    %v531 = vpack.c.bf16 %v529, %v528
    %v532 = vld [vmem:[#allocation7] sm:$0xf]
    %v533 = vld [vmem:[#allocation7 + $0x4] sm:$0xf]
    %v534 = vld [vmem:[#allocation7 + $0x8] sm:$0xf]
    %v535 = vld [vmem:[#allocation7 + $0xc] sm:$0xf]
    %v536 = vld [vmem:[#allocation7 + $0x10] sm:$0xf]
    %v537 = vld [vmem:[#allocation7 + $0x14] sm:$0xf]
    %v538 = vld [vmem:[#allocation7 + $0x18] sm:$0xf]
    %v539 = vld [vmem:[#allocation7 + $0x1c] sm:$0xf]
    %v540 = vld [vmem:[#allocation7 + $0x20] sm:$0xf]
    %v541 = vld [vmem:[#allocation7 + $0x24] sm:$0xf]
    %v542 = vld [vmem:[#allocation7 + $0x28] sm:$0xf]
    %v543 = vld [vmem:[#allocation7 + $0x2c] sm:$0xf]
    %v544 = vld [vmem:[#allocation7 + $0x30] sm:$0xf]
    %v545 = vld [vmem:[#allocation7 + $0x34] sm:$0xf]
    %v546 = vld [vmem:[#allocation7 + $0x38] sm:$0xf]
    %v547 = vld [vmem:[#allocation7 + $0x3c] sm:$0xf]
    %v564 = vunpack.c.l.b16 %v532
    %v565 = vunpack.c.l.b16 %v533
    %v566 = vunpack.c.l.b16 %v534
    %v567 = vunpack.c.l.b16 %v535
    %v568 = vunpack.c.l.b16 %v536
    %v569 = vunpack.c.l.b16 %v537
    %v570 = vunpack.c.l.b16 %v538
    %v571 = vunpack.c.l.b16 %v539
    %v572 = vunpack.c.l.b16 %v540
    %v573 = vunpack.c.l.b16 %v541
    %v574 = vunpack.c.l.b16 %v542
    %v575 = vunpack.c.l.b16 %v543
    %v576 = vunpack.c.l.b16 %v544
    %v577 = vunpack.c.l.b16 %v545
    %v578 = vunpack.c.l.b16 %v546
    %v579 = vunpack.c.l.b16 %v547
    %v580 = vpack.c.b16 %v565, %v564
    %v581 = vpack.c.b16 %v567, %v566
    %v582 = vpack.c.b16 %v569, %v568
    %v583 = vpack.c.b16 %v571, %v570
    %v584 = vpack.c.b16 %v573, %v572
    %v585 = vpack.c.b16 %v575, %v574
    %v586 = vpack.c.b16 %v577, %v576
    %v587 = vpack.c.b16 %v579, %v578
    %596 = vmatprep.subr.bf16.mxu0 0
    %597 = vmatpush1.bf16.msra.mxu0 %v580
    %598 = vmatprep.subr.bf16.mxu0 0
    %599 = vmatpush1.bf16.msra.mxu0 %v581
    %600 = vmatprep.subr.bf16.mxu0 0
    %601 = vmatpush1.bf16.msra.mxu0 %v582
    %602 = vmatprep.subr.bf16.mxu0 0
    %603 = vmatpush1.bf16.msra.mxu0 %v583
    %604 = vmatprep.subr.bf16.mxu0 0
    %605 = vmatpush1.bf16.msra.mxu0 %v584
    %606 = vmatprep.subr.bf16.mxu0 0
    %607 = vmatpush1.bf16.msra.mxu0 %v585
    %608 = vmatprep.subr.bf16.mxu0 0
    %609 = vmatpush1.bf16.msra.mxu0 %v586
    %610 = vmatprep.subr.bf16.mxu0 0
    %611 = vmatpush1.bf16.msra.mxu0 %v587
    %612 = vmatprep.subr.bf16.mxu0 0
    %613 = vmatpush1.bf16.msra.mxu0 0
    %614 = vmatprep.subr.bf16.mxu0 0
    %615 = vmatpush1.bf16.msra.mxu0 0
    %616 = vmatprep.subr.bf16.mxu0 0
    %617 = vmatpush1.bf16.msra.mxu0 0
    %618 = vmatprep.subr.bf16.mxu0 0
    %619 = vmatpush1.bf16.msra.mxu0 0
    %620 = vmatprep.subr.bf16.mxu0 0
    %621 = vmatpush1.bf16.msra.mxu0 0
    %622 = vmatprep.subr.bf16.mxu0 0
    %623 = vmatpush1.bf16.msra.mxu0 0
    %624 = vmatprep.subr.bf16.mxu0 0
    %625 = vmatpush1.bf16.msra.mxu0 0
    %626 = vmatprep.subr.bf16.mxu0 0
    %627 = vmatpush1.bf16.msra.mxu0 0
    %628 = vmatprep.mubr.bf16.mxu0 0
    %629 = vmatmul.mubr.bf16.gmra.mrb[0].mxu0 %v530
    %v630 = vpop.f32.mrb[0].mxu0
    %v631 = vadd.f32 0.0, %v630
    %v632 = vpop.f32.mrb[0].mxu0
    %v633 = vpop.f32.mrb[0].mxu0
    %v634 = vadd.f32 0.0, %v633
    %v635 = vpop.f32.mrb[0].mxu0
    %636 = vmatprep.mubr.bf16.mxu0 0
    %637 = vmatmul.mubr.bf16.gmra.mrb[0].mxu0 %v531
    %v638 = vpop.f32.mrb[0].mxu0
    %v639 = vadd.f32 0.0, %v638
    %v640 = vpop.f32.mrb[0].mxu0
    %v641 = vpop.f32.mrb[0].mxu0
    %v642 = vadd.f32 0.0, %v641
    %v643 = vpop.f32.mrb[0].mxu0
    %644 = vdwg.mxu0
    %s645 = scalar_lea.vmem [#allocation7], 64
    %v646 = vld [vmem:[%s645] sm:$0xf]
    %v647 = vld [vmem:[%s645 + $0x4] sm:$0xf]
    %v648 = vld [vmem:[%s645 + $0x8] sm:$0xf]
    %v649 = vld [vmem:[%s645 + $0xc] sm:$0xf]
    %v650 = vld [vmem:[%s645 + $0x10] sm:$0xf]
    %v651 = vld [vmem:[%s645 + $0x14] sm:$0xf]
    %v652 = vld [vmem:[%s645 + $0x18] sm:$0xf]
    %v653 = vld [vmem:[%s645 + $0x1c] sm:$0xf]
    %v654 = vld [vmem:[%s645 + $0x20] sm:$0xf]
    %v655 = vld [vmem:[%s645 + $0x24] sm:$0xf]
    %v656 = vld [vmem:[%s645 + $0x28] sm:$0xf]
    %v657 = vld [vmem:[%s645 + $0x2c] sm:$0xf]
    %v658 = vld [vmem:[%s645 + $0x30] sm:$0xf]
    %v659 = vld [vmem:[%s645 + $0x34] sm:$0xf]
    %v660 = vld [vmem:[%s645 + $0x38] sm:$0xf]
    %v661 = vld [vmem:[%s645 + $0x3c] sm:$0xf]
    %v678 = vunpack.c.l.b16 %v646
    %v679 = vunpack.c.l.b16 %v647
    %v680 = vunpack.c.l.b16 %v648
    %v681 = vunpack.c.l.b16 %v649
    %v682 = vunpack.c.l.b16 %v650
    %v683 = vunpack.c.l.b16 %v651
    %v684 = vunpack.c.l.b16 %v652
    %v685 = vunpack.c.l.b16 %v653
    %v686 = vunpack.c.l.b16 %v654
    %v687 = vunpack.c.l.b16 %v655
    %v688 = vunpack.c.l.b16 %v656
    %v689 = vunpack.c.l.b16 %v657
    %v690 = vunpack.c.l.b16 %v658
    %v691 = vunpack.c.l.b16 %v659
    %v692 = vunpack.c.l.b16 %v660
    %v693 = vunpack.c.l.b16 %v661
    %v694 = vpack.c.b16 %v679, %v678
    %v695 = vpack.c.b16 %v681, %v680
    %v696 = vpack.c.b16 %v683, %v682
    %v697 = vpack.c.b16 %v685, %v684
    %v698 = vpack.c.b16 %v687, %v686
    %v699 = vpack.c.b16 %v689, %v688
    %v700 = vpack.c.b16 %v691, %v690
    %v701 = vpack.c.b16 %v693, %v692
    %710 = vmatprep.subr.bf16.mxu0 0
    %711 = vmatpush1.bf16.msra.mxu0 %v694
    %712 = vmatprep.subr.bf16.mxu0 0
    %713 = vmatpush1.bf16.msra.mxu0 %v695
    %714 = vmatprep.subr.bf16.mxu0 0
    %715 = vmatpush1.bf16.msra.mxu0 %v696
    %716 = vmatprep.subr.bf16.mxu0 0
    %717 = vmatpush1.bf16.msra.mxu0 %v697
    %718 = vmatprep.subr.bf16.mxu0 0
    %719 = vmatpush1.bf16.msra.mxu0 %v698
    %720 = vmatprep.subr.bf16.mxu0 0
    %721 = vmatpush1.bf16.msra.mxu0 %v699
    %722 = vmatprep.subr.bf16.mxu0 0
    %723 = vmatpush1.bf16.msra.mxu0 %v700
    %724 = vmatprep.subr.bf16.mxu0 0
    %725 = vmatpush1.bf16.msra.mxu0 %v701
    %726 = vmatprep.subr.bf16.mxu0 0
    %727 = vmatpush1.bf16.msra.mxu0 0
    %728 = vmatprep.subr.bf16.mxu0 0
    %729 = vmatpush1.bf16.msra.mxu0 0
    %730 = vmatprep.subr.bf16.mxu0 0
    %731 = vmatpush1.bf16.msra.mxu0 0
    %732 = vmatprep.subr.bf16.mxu0 0
    %733 = vmatpush1.bf16.msra.mxu0 0
    %734 = vmatprep.subr.bf16.mxu0 0
    %735 = vmatpush1.bf16.msra.mxu0 0
    %736 = vmatprep.subr.bf16.mxu0 0
    %737 = vmatpush1.bf16.msra.mxu0 0
    %738 = vmatprep.subr.bf16.mxu0 0
    %739 = vmatpush1.bf16.msra.mxu0 0
    %740 = vmatprep.subr.bf16.mxu0 0
    %741 = vmatpush1.bf16.msra.mxu0 0
    %742 = vmatprep.mubr.bf16.mxu0 0
    %743 = vmatmul.mubr.bf16.gmra.mrb[0].mxu0 %v530
    %v744 = vpop.f32.mrb[0].mxu0
    %v745 = vadd.f32 0.0, %v744
    %v746 = vpop.f32.mrb[0].mxu0
    %v747 = vpop.f32.mrb[0].mxu0
    %v748 = vadd.f32 0.0, %v747
    %v749 = vpop.f32.mrb[0].mxu0
    %750 = vmatprep.mubr.bf16.mxu0 0
    %751 = vmatmul.mubr.bf16.gmra.mrb[0].mxu0 %v531
    %v752 = vpop.f32.mrb[0].mxu0
    %v753 = vadd.f32 0.0, %v752
    %v754 = vpop.f32.mrb[0].mxu0
    %v755 = vpop.f32.mrb[0].mxu0
    %v756 = vadd.f32 0.0, %v755
    %v757 = vpop.f32.mrb[0].mxu0
    %758 = vdwg.mxu0
    %s759 = scalar_lea.vmem [#allocation7], 128
    %v760 = vld [vmem:[%s759] sm:$0xf]
    %v761 = vld [vmem:[%s759 + $0x4] sm:$0xf]
    %v762 = vld [vmem:[%s759 + $0x8] sm:$0xf]
    %v763 = vld [vmem:[%s759 + $0xc] sm:$0xf]
    %v764 = vld [vmem:[%s759 + $0x10] sm:$0xf]
    %v765 = vld [vmem:[%s759 + $0x14] sm:$0xf]
    %v766 = vld [vmem:[%s759 + $0x18] sm:$0xf]
    %v767 = vld [vmem:[%s759 + $0x1c] sm:$0xf]
    %v768 = vld [vmem:[%s759 + $0x20] sm:$0xf]
    %v769 = vld [vmem:[%s759 + $0x24] sm:$0xf]
    %v770 = vld [vmem:[%s759 + $0x28] sm:$0xf]
    %v771 = vld [vmem:[%s759 + $0x2c] sm:$0xf]
    %v772 = vld [vmem:[%s759 + $0x30] sm:$0xf]
    %v773 = vld [vmem:[%s759 + $0x34] sm:$0xf]
    %v774 = vld [vmem:[%s759 + $0x38] sm:$0xf]
    %v775 = vld [vmem:[%s759 + $0x3c] sm:$0xf]
    %v792 = vunpack.c.l.b16 %v760
    %v793 = vunpack.c.l.b16 %v761
    %v794 = vunpack.c.l.b16 %v762
    %v795 = vunpack.c.l.b16 %v763
    %v796 = vunpack.c.l.b16 %v764
    %v797 = vunpack.c.l.b16 %v765
    %v798 = vunpack.c.l.b16 %v766
    %v799 = vunpack.c.l.b16 %v767
    %v800 = vunpack.c.l.b16 %v768
    %v801 = vunpack.c.l.b16 %v769
    %v802 = vunpack.c.l.b16 %v770
    %v803 = vunpack.c.l.b16 %v771
    %v804 = vunpack.c.l.b16 %v772
    %v805 = vunpack.c.l.b16 %v773
    %v806 = vunpack.c.l.b16 %v774
    %v807 = vunpack.c.l.b16 %v775
    %v808 = vpack.c.b16 %v793, %v792
    %v809 = vpack.c.b16 %v795, %v794
    %v810 = vpack.c.b16 %v797, %v796
    %v811 = vpack.c.b16 %v799, %v798
    %v812 = vpack.c.b16 %v801, %v800
    %v813 = vpack.c.b16 %v803, %v802
    %v814 = vpack.c.b16 %v805, %v804
    %v815 = vpack.c.b16 %v807, %v806
    %824 = vmatprep.subr.bf16.mxu0 0
    %825 = vmatpush1.bf16.msra.mxu0 %v808
    %826 = vmatprep.subr.bf16.mxu0 0
    %827 = vmatpush1.bf16.msra.mxu0 %v809
    %828 = vmatprep.subr.bf16.mxu0 0
    %829 = vmatpush1.bf16.msra.mxu0 %v810
    %830 = vmatprep.subr.bf16.mxu0 0
    %831 = vmatpush1.bf16.msra.mxu0 %v811
    %832 = vmatprep.subr.bf16.mxu0 0
    %833 = vmatpush1.bf16.msra.mxu0 %v812
    %834 = vmatprep.subr.bf16.mxu0 0
    %835 = vmatpush1.bf16.msra.mxu0 %v813
    %836 = vmatprep.subr.bf16.mxu0 0
    %837 = vmatpush1.bf16.msra.mxu0 %v814
    %838 = vmatprep.subr.bf16.mxu0 0
    %839 = vmatpush1.bf16.msra.mxu0 %v815
    %840 = vmatprep.subr.bf16.mxu0 0
    %841 = vmatpush1.bf16.msra.mxu0 0
    %842 = vmatprep.subr.bf16.mxu0 0
    %843 = vmatpush1.bf16.msra.mxu0 0
    %844 = vmatprep.subr.bf16.mxu0 0
    %845 = vmatpush1.bf16.msra.mxu0 0
    %846 = vmatprep.subr.bf16.mxu0 0
    %847 = vmatpush1.bf16.msra.mxu0 0
    %848 = vmatprep.subr.bf16.mxu0 0
    %849 = vmatpush1.bf16.msra.mxu0 0
    %850 = vmatprep.subr.bf16.mxu0 0
    %851 = vmatpush1.bf16.msra.mxu0 0
    %852 = vmatprep.subr.bf16.mxu0 0
    %853 = vmatpush1.bf16.msra.mxu0 0
    %854 = vmatprep.subr.bf16.mxu0 0
    %855 = vmatpush1.bf16.msra.mxu0 0
    %856 = vmatprep.mubr.bf16.mxu0 0
    %857 = vmatmul.mubr.bf16.gmra.mrb[0].mxu0 %v530
    %v858 = vpop.f32.mrb[0].mxu0
    %v859 = vadd.f32 0.0, %v858
    %v860 = vpop.f32.mrb[0].mxu0
    %v861 = vpop.f32.mrb[0].mxu0
    %v862 = vadd.f32 0.0, %v861
    %v863 = vpop.f32.mrb[0].mxu0
    %864 = vmatprep.mubr.bf16.mxu0 0
    %865 = vmatmul.mubr.bf16.gmra.mrb[0].mxu0 %v531
    %v866 = vpop.f32.mrb[0].mxu0
    %v867 = vadd.f32 0.0, %v866
    %v868 = vpop.f32.mrb[0].mxu0
    %v869 = vpop.f32.mrb[0].mxu0
    %v870 = vadd.f32 0.0, %v869
    %v871 = vpop.f32.mrb[0].mxu0
    %872 = vdwg.mxu0
    %v873 = vrot.slane %v631, 7
    %v874 = vrot.slane %v634, 7
    %v875 = vrot.slane %v639, 7
    %v876 = vrot.slane %v642, 7
    %v877 = vsel %vm470, %v875, %v876
    %v878 = vsel %vm470, %v874, %v875
    %v879 = vsel %vm470, %v873, %v874
    %v880 = vsel %vm470, %v876, %v873
    %v881 = vsel %vm85, %v880, 0.0
    %v882 = vsel %vm86, %v879, 0.0
    %v883 = vsel %vm87, %v878, 0.0
    %v884 = vsel %vm88, %v877, 0.0
    %v885 = vadd.f32 %v881, %v745
    %v886 = vadd.f32 %v882, %v748
    %v887 = vadd.f32 %v883, %v753
    %v888 = vadd.f32 %v884, %v756
    %v889 = vrot.slane %v859, 1
    %v890 = vrot.slane %v862, 1
    %v891 = vrot.slane %v867, 1
    %v892 = vrot.slane %v870, 1
    %v893 = vsel %vm487, %v891, %v892
    %v894 = vsel %vm487, %v890, %v891
    %v895 = vsel %vm487, %v889, %v890
    %v896 = vsel %vm487, %v892, %v889
    %v897 = vsel %vm89, %v895, 0.0
    %v898 = vsel %vm90, %v894, 0.0
    %v899 = vsel %vm91, %v893, 0.0
    %v900 = vsel %vm92, %v896, 0.0
    %v901 = vadd.f32 %v885, %v897
    %v902 = vadd.f32 %v886, %v898
    %v903 = vadd.f32 %v887, %v899
    %v904 = vadd.f32 %v888, %v900
    %v905 = vld [vmem:[%s7] sm:$0x1]
    %v907 = vlaneseq
    %v908 = vshrl.u32 %v907, 7
    %v909 = vsub.s32 0, %v908
    %v910 = vrot.slane %v905, %v909
    %v912 = vadd.f32 %v901, %v910
    %v913 = vadd.f32 %v902, %v910
    %v914 = vadd.f32 %v903, %v910
    %v915 = vadd.f32 %v904, %v910
    %v916 = vmul.f32 %v912, 0.01
    %v917 = vmul.f32 %v913, 0.01
    %v918 = vmul.f32 %v914, 0.01
    %v919 = vmul.f32 %v915, 0.01
    %v920 = vmax.f32 %v912, %v916
    %v921 = vmax.f32 %v913, %v917
    %v922 = vmax.f32 %v914, %v918
    %v923 = vmax.f32 %v915, %v919
    %924 = vst [vmem:[#allocation8] sm:$0xff] %v920
    %925 = vst [vmem:[#allocation8 + $0x8] sm:$0xff] %v921
    %926 = vst [vmem:[#allocation8 + $0x10] sm:$0xff] %v922
    %927 = vst [vmem:[#allocation8 + $0x18] sm:$0xff] %v923
    // Predicated region
    $region46: #{tpu_custom_call.1} parent=1 // pred_check
      _
    $region47: #{tpu_custom_call.1} parent=1 // pred_check_branch
      %929 = sbr.rel (0) target = $region49
    $region48: #{tpu_custom_call.1} parent=1 // pred_region
      %s931 = ssub.s32 512, 512
      %932 = vsyncadd [#allocation4], %s931
      %s933 = sshll.u32 [#allocation8], 4
      %s934 = int_to_ptr.vmem [resolvable:$true] %s933
      %939 = dma.vmem_to_hbm [thread:$0]  %s934, 512, %s8, [#allocation4], 128, 128, 8
    $region49: #{tpu_custom_call.1} parent=1 // pred_fallthru
      _
    // Predicated region
    $region50: #{tpu_custom_call.1} parent=1 // pred_check
      _
    $region51: #{tpu_custom_call.1} parent=1 // pred_check_branch
      %941 = sbr.rel (0) target = $region53
    $region52: #{tpu_custom_call.1} parent=1 // pred_region
      %942 = dma.done [#allocation4], 512
    $region53: #{tpu_custom_call.1} parent=1 // pred_fallthru
      _
    %943 = vsyncpa [#allocation3], 1
    %944 = vsyncpa [#allocation6], 1
    %945 = vsyncpa [#allocation4], 1

</llo_original>
